<compile_context>
chip_gen: v7x
topology: tpu7x:2x2x1
jax: 0.10.0
libtpu: 0.0.40
codegen_flags: <defaults>
</compile_context>

<pallas_src>
import jax
import jax.numpy as jnp
from jax import lax
from jax.experimental import pallas as pl
from jax.experimental.pallas import tpu as pltpu


# ----------------------------- Pallas kernel ------------------------------ #
def _sch_loss_kernel(feat_ref, w1_ref, w2_ref, w3_ref, sc_ref, tgt_ref,
                     out_ref):
    t = pl.program_id(1)
    thw = feat_ref.shape[2]

    @pl.when(t == 0)
    def _init():
        out_ref[...] = jnp.zeros_like(out_ref)

    # ---- dynamic 3-layer 1x1-conv head for ALL objects: 3 MXU matmuls ----
    h1 = jnp.maximum(
        jnp.dot(w1_ref[0], feat_ref[0], preferred_element_type=jnp.float32),
        0.0)                                                    # (MCP, THW)
    h2 = jnp.maximum(
        jnp.dot(w2_ref[0], h1, preferred_element_type=jnp.float32), 0.0)
    logit = jnp.dot(w3_ref[0], h2,
                    preferred_element_type=jnp.float32)          # (MP, THW)

    # _sigmoid: clamp(sigmoid(x), 1e-4, 1 - 1e-4)
    hm = jnp.clip(jax.nn.sigmoid(logit), 1e-4, 1.0 - 1e-4)
    one_m = 1.0 - hm

    # ---- fused FastFocalLoss over the whole (MP, THW) tile ----
    gt = tgt_ref[0]                                              # (MP, THW)
    g = 1.0 - gt
    g2 = g * g
    neg = jnp.log(one_m) * (hm * hm) * (g2 * g2)

    mk = sc_ref[0][:, 0:1]                                       # (MP, 1)
    idx = sc_ref[0][:, 1:2].astype(jnp.int32)                    # (MP, 1)
    pix = lax.broadcasted_iota(jnp.int32, (1, thw), 1) + t * thw
    pos = jnp.where(pix == idx, jnp.log(hm) * (one_m * one_m) * mk, 0.0)

    # single cross-lane reduction per grid step -> per-batch accumulator
    out_ref[...] += jnp.sum(neg + pos)


# ------------------------------- glue (JAX) -------------------------------- #
def _tranpose_and_gather_feat(feat, ind):
    # feat: (B, K, H, W), ind: (B, M) flat indices into H*W  ->  (B, M, K)
    B, K, H, W = feat.shape
    f = jnp.transpose(feat, (0, 2, 3, 1)).reshape(B, H * W, K)
    return jnp.take_along_axis(f, ind[:, :, None], axis=1)


def _split_weight(weight, C):
    # weight: (B, M, (C+2)*C + C + C*C + C + C + 1)
    B, M, _ = weight.shape
    C2 = C + 2
    s = 0
    w1 = weight[:, :, s:s + C2 * C].reshape(B, M, C, C2); s += C2 * C
    b1 = weight[:, :, s:s + C];                           s += C
    w2 = weight[:, :, s:s + C * C].reshape(B, M, C, C);   s += C * C
    b2 = weight[:, :, s:s + C];                           s += C
    w3 = weight[:, :, s:s + C];                           s += C
    b3 = weight[:, :, s]
    return w1, b1, w2, b2, w3, b3


def _pick_hw_tile(HW):
    for t in (4096, 2048, 1024, 512, 256, 128):
        if HW % t == 0:
            return t
    return HW


def sch_loss_pallas(sch_feat, conv_weight, mask, pre_ind, target, ind,
                    feat_channel, kmf_ind=None, hw_tile=None):
    f32 = jnp.float32
    B, C, H, W = sch_feat.shape
    assert C == feat_channel
    M = target.shape[1]
    HW = H * W
    CP = ((C + 1 + 7) // 8) * 8        # per-object rows (incl. bias-carrier row)
    Dp = ((C + 3 + 7) // 8) * 8        # layer-1 contraction width [feat|x|y|1|pad]
    MP = ((M + 7) // 8) * 8            # sublane-padded object count
    MCP = M * CP
    if hw_tile is not None and HW % hw_tile == 0:
        THW = hw_tile
    else:
        THW = _pick_hw_tile(HW)

    weight = _tranpose_and_gather_feat(conv_weight, pre_ind)    # (B, M, K)
    w1, b1, w2, b2, w3, b3 = _split_weight(weight, C)

    src = kmf_ind if kmf_ind is not None else pre_ind
    px = (src % W).astype(f32)
    # NOTE: matches torch semantics `y = pre_ind / w` (true float division)
    py = src.astype(f32) / jnp.float32(W)

    # ---- layer 1: rows [w1a | w1x | w1y | b1_eff] + a "ones" carrier row ----
    w1a = w1[..., :C]                                            # (B, M, C, C)
    w1x = w1[..., C]                                             # (B, M, C)
    w1y = w1[..., C + 1]                                         # (B, M, C)
    b1_eff = b1 - (w1x * px[..., None] + w1y * py[..., None]) / 128.0
    rows = jnp.concatenate(
        [w1a, w1x[..., None], w1y[..., None], b1_eff[..., None]], axis=-1)
    rows = jnp.pad(rows, ((0, 0), (0, 0), (0, 0), (0, Dp - (C + 3))))
    carrier = jnp.zeros((B, M, CP - C, Dp), f32).at[:, :, 0, C + 2].set(1.0)
    w1pack = jnp.concatenate([rows, carrier], axis=2).reshape(B, MCP, Dp)

    # ---- layer 2: block-diagonal (MCP, MCP); b2 + ones propagation folded ----
    blk = jnp.zeros((B, M, CP, CP), f32)
    blk = blk.at[:, :, :C, :C].set(w2)        # real weights
    blk = blk.at[:, :, :C, C].set(b2)         # bias via the ones row of h1
    blk = blk.at[:, :, C, C].set(1.0)         # keep the ones row alive for b3
    eyeM = jnp.eye(M, dtype=f32)
    w2blk = eyeM[None, :, :, None, None] * blk[:, :, None, :, :]   # (B,M,M,CP,CP)
    w2blk = jnp.transpose(w2blk, (0, 1, 3, 2, 4)).reshape(B, MCP, MCP)

    # ---- layer 3: (MP, MCP) with b3 folded onto the carrier column ----
    w3p = jnp.zeros((B, M, CP), f32).at[..., :C].set(w3).at[..., C].set(b3)
    w3g = (eyeM[None, :, :, None] * w3p[:, :, None, :]).reshape(B, M, MCP)
    w3g = jnp.pad(w3g, ((0, 0), (0, MP - M), (0, 0)))

    # ---- augmented features: [feat | x/128 | y/128 | 1 | pad] rows ----
    pix = jnp.arange(HW, dtype=jnp.int32)
    xs = (pix % W).astype(f32) / 128.0
    ys = (pix // W).astype(f32) / 128.0
    ones = jnp.ones((HW,), f32)
    extra = jnp.broadcast_to(jnp.stack([xs, ys, ones], 0)[None], (B, 3, HW))
    feat_aug = jnp.concatenate(
        [sch_feat.reshape(B, C, HW).astype(f32), extra], axis=1)
    feat_aug = jnp.pad(feat_aug, ((0, 0), (0, Dp - (C + 3)), (0, 0)))

    # ---- per-object scalar columns [mask, ind]; padded rows contribute 0 ----
    sc = jnp.stack([mask.astype(f32), ind.astype(f32)], axis=-1)   # (B, M, 2)
    sc = jnp.pad(sc, ((0, 0), (0, MP - M), (0, 0)))
    tgt_flat = jnp.pad(target.reshape(B, M, HW).astype(f32),
                       ((0, 0), (0, MP - M), (0, 0)), constant_values=1.0)

    grid = (B, HW // THW)
    grid_spec = pltpu.PrefetchScalarGridSpec(
        num_scalar_prefetch=0,
        grid=grid,
        in_specs=[
            pl.BlockSpec((1, Dp, THW), lambda b, t: (b, 0, t)),    # feat_aug
            pl.BlockSpec((1, MCP, Dp), lambda b, t: (b, 0, 0)),    # w1pack
            pl.BlockSpec((1, MCP, MCP), lambda b, t: (b, 0, 0)),   # w2 block-diag
            pl.BlockSpec((1, MP, MCP), lambda b, t: (b, 0, 0)),    # w3 (+b3)
            pl.BlockSpec((1, MP, 2), lambda b, t: (b, 0, 0)),      # [mask, ind]
            pl.BlockSpec((1, MP, THW), lambda b, t: (b, 0, t)),    # target
        ],
        out_specs=pl.BlockSpec((1, 1, 1), lambda b, t: (b, 0, 0)),
    )

    per_batch = pl.pallas_call(
        _sch_loss_kernel,
        out_shape=jax.ShapeDtypeStruct((B, 1, 1), jnp.float32),
        grid_spec=grid_spec,
        compiler_params=pltpu.CompilerParams(
            dimension_semantics=("parallel", "arbitrary")),
    )(feat_aug, w1pack, w2blk, w3g, sc, tgt_flat)

    total = jnp.sum(per_batch)             # sum of neg + masked pos over (b, m)
    num_pos = jnp.sum(mask.astype(f32))    # computed outside the kernel
    return jnp.where(num_pos == 0.0, -total, -total / num_pos)


# ----------------------- pure-JAX reference (check) ------------------------ #
def sch_loss_reference(sch_feat, conv_weight, mask, pre_ind, target, ind,
                       feat_channel):
    B, C, H, W = sch_feat.shape
    M = target.shape[1]
    weight = _tranpose_and_gather_feat(conv_weight, pre_ind)
    w1, b1, w2, b2, w3, b3 = _split_weight(weight, C)

    x = (pre_ind % W).astype(jnp.float32)
    y = pre_ind.astype(jnp.float32) / W
    yy, xx = jnp.meshgrid(jnp.arange(H, dtype=jnp.float32),
                          jnp.arange(W, dtype=jnp.float32), indexing="ij")
    x_rel = (xx[None, None] - x[:, :, None, None]) / 128.0
    y_rel = (yy[None, None] - y[:, :, None, None]) / 128.0
    feat = jnp.concatenate(
        [jnp.broadcast_to(sch_feat[:, None], (B, M, C, H, W)),
         x_rel[:, :, None], y_rel[:, :, None]], axis=2)
    h1 = jax.nn.relu(jnp.einsum("bmoc,bmchw->bmohw", w1, feat)
                     + b1[..., None, None])
    h2 = jax.nn.relu(jnp.einsum("bmoc,bmchw->bmohw", w2, h1)
                     + b2[..., None, None])
    logit = jnp.einsum("bmc,bmchw->bmhw", w3, h2) + b3[..., None, None]
    hm = jnp.clip(jax.nn.sigmoid(logit), 1e-4, 1.0 - 1e-4)

    neg = jnp.sum(jnp.log(1.0 - hm) * hm * hm * (1.0 - target) ** 4)
    hm_flat = hm.reshape(B, M, H * W)
    pos_pred = jnp.take_along_axis(hm_flat, ind[:, :, None], axis=2)[..., 0]
    pos = jnp.sum(jnp.log(pos_pred) * (1.0 - pos_pred) ** 2 * mask)
    num_pos = jnp.sum(mask)
    return jnp.where(num_pos == 0.0, -neg, -(pos + neg) / num_pos)


# ---------------------------------- main ----------------------------------- #
if __name__ == "__main__":
    B, C, H, W, M = 2, 4, 16, 16, 4
    K = (C + 2) * C + C + C * C + C + C + 1  # 53

    key = jax.random.PRNGKey(0)
    ks = jax.random.split(key, 6)
    sch_feat = jax.random.normal(ks[0], (B, C, H, W), jnp.float32)
    conv_weight = jax.random.normal(ks[1], (B, K, H, W), jnp.float32) * 0.2
    target = jax.random.uniform(ks[2], (B, M, H, W), dtype=jnp.float32)
    pre_ind = jax.random.randint(ks[3], (B, M), 0, H * W, jnp.int32)
    ind = jax.random.randint(ks[4], (B, M), 0, H * W, jnp.int32)
    mask = (jax.random.uniform(ks[5], (B, M)) > 0.3).astype(jnp.float32)

    # hw_tile=128 -> 2 pixel tiles per batch, exercising the accumulator path.
    loss = jax.block_until_ready(
        sch_loss_pallas(sch_feat, conv_weight, mask, pre_ind, target, ind, C,
                        hw_tile=128))
    ref = sch_loss_reference(sch_feat, conv_weight, mask, pre_ind, target,
                             ind, C)

    assert bool(jnp.isfinite(loss))
    assert abs(float(loss) - float(ref)) <= 1e-2 * (1.0 + abs(float(ref)))
    print("KERNEL_OK")
</pallas_src>

<mosaic_0001>
module attributes {stable_mosaic.version = 11 : i64} {
  func.func @_sch_loss_kernel(%arg0: i32, %arg1: i32, %arg2: memref<1x8x128xf32, #tpu.memory_space<vmem>>, %arg3: memref<1x32x8xf32, #tpu.memory_space<vmem>>, %arg4: memref<1x32x32xf32, #tpu.memory_space<vmem>>, %arg5: memref<1x8x32xf32, #tpu.memory_space<vmem>>, %arg6: memref<1x8x2xf32, #tpu.memory_space<vmem>>, %arg7: memref<1x8x128xf32, #tpu.memory_space<vmem>>, %arg8: memref<1x1x1xf32, #tpu.memory_space<vmem>>) attributes {dimension_semantics = [#tpu.dimension_semantics<parallel>, #tpu.dimension_semantics<arbitrary>], iteration_bounds = array<i64: 2, 2>, scalar_prefetch = 0 : i64, scratch_operands = 0 : i64, tpu.core_type = #tpu.core_type<tc>, window_params = [{transform_indices = @transform_0, window_bounds = array<i64: 1, 8, 128>}, {transform_indices = @transform_1, window_bounds = array<i64: 1, 32, 8>}, {transform_indices = @transform_2, window_bounds = array<i64: 1, 32, 32>}, {transform_indices = @transform_3, window_bounds = array<i64: 1, 8, 32>}, {transform_indices = @transform_4, window_bounds = array<i64: 1, 8, 2>}, {transform_indices = @transform_5, window_bounds = array<i64: 1, 8, 128>}, {transform_indices = @transform_6, window_bounds = array<i64: 1, 1, 1>}]} {
    %c0_i32 = arith.constant 0 : i32
    %0 = arith.cmpi eq, %arg1, %c0_i32 : i32
    %1 = arith.extui %0 : i1 to i32
    %c0_i32_0 = arith.constant 0 : i32
    %2 = arith.cmpi ne, %1, %c0_i32_0 : i32
    scf.if %2 {
      %cst_38 = arith.constant 0.000000e+00 : f32
      %69 = vector.broadcast %cst_38 : f32 to vector<1x1x1xf32>
      %c0_39 = arith.constant 0 : index
      %c0_40 = arith.constant 0 : index
      %c0_41 = arith.constant 0 : index
      %70 = vector.load %arg8[%c0_39, %c0_40, %c0_41] : memref<1x1x1xf32, #tpu.memory_space<vmem>>, vector<1x1x1xf32>
      tpu.vector_store %arg8[%c0_39, %c0_40, %c0_41], %69 {strides = array<i32>} : memref<1x1x1xf32, #tpu.memory_space<vmem>>, vector<1x1x1xf32>,
    } else {
    }
    %c0 = arith.constant 0 : index
    %c0_1 = arith.constant 0 : index
    %c0_2 = arith.constant 0 : index
    %3 = vector.load %arg3[%c0, %c0_1, %c0_2] : memref<1x32x8xf32, #tpu.memory_space<vmem>>, vector<1x32x8xf32>
    %4 = vector.shape_cast %3 : vector<1x32x8xf32> to vector<32x8xf32>
    %c0_3 = arith.constant 0 : index
    %c0_4 = arith.constant 0 : index
    %c0_5 = arith.constant 0 : index
    %5 = vector.load %arg2[%c0_3, %c0_4, %c0_5] : memref<1x8x128xf32, #tpu.memory_space<vmem>>, vector<1x8x128xf32>
    %6 = vector.shape_cast %5 : vector<1x8x128xf32> to vector<8x128xf32>
    %cst = arith.constant dense<0.000000e+00> : vector<32x128xf32>
    %7 = tpu.matmul %4, %6, %cst {dimension_numbers = #tpu.dot_dimension_numbers<[1], [0], [0], [1], [0, 0, 1, 1], [], []>} : vector<32x8xf32>, vector<8x128xf32>, vector<32x128xf32> -> vector<32x128xf32>
    %cst_6 = arith.constant 0.000000e+00 : f32
    %8 = vector.broadcast %cst_6 : f32 to vector<32x128xf32>
    %9 = arith.maximumf %7, %8 : vector<32x128xf32>
    %c0_7 = arith.constant 0 : index
    %c0_8 = arith.constant 0 : index
    %c0_9 = arith.constant 0 : index
    %10 = vector.load %arg4[%c0_7, %c0_8, %c0_9] : memref<1x32x32xf32, #tpu.memory_space<vmem>>, vector<1x32x32xf32>
    %11 = vector.shape_cast %10 : vector<1x32x32xf32> to vector<32x32xf32>
    %cst_10 = arith.constant dense<0.000000e+00> : vector<32x128xf32>
    %12 = tpu.matmul %11, %9, %cst_10 {dimension_numbers = #tpu.dot_dimension_numbers<[1], [0], [0], [1], [0, 0, 1, 1], [], []>} : vector<32x32xf32>, vector<32x128xf32>, vector<32x128xf32> -> vector<32x128xf32>
    %cst_11 = arith.constant 0.000000e+00 : f32
    %13 = vector.broadcast %cst_11 : f32 to vector<32x128xf32>
    %14 = arith.maximumf %12, %13 : vector<32x128xf32>
    %c0_12 = arith.constant 0 : index
    %c0_13 = arith.constant 0 : index
    %c0_14 = arith.constant 0 : index
    %15 = vector.load %arg5[%c0_12, %c0_13, %c0_14] : memref<1x8x32xf32, #tpu.memory_space<vmem>>, vector<1x8x32xf32>
    %16 = vector.shape_cast %15 : vector<1x8x32xf32> to vector<8x32xf32>
    %cst_15 = arith.constant dense<0.000000e+00> : vector<8x128xf32>
    %17 = tpu.matmul %16, %14, %cst_15 {dimension_numbers = #tpu.dot_dimension_numbers<[1], [0], [0], [1], [0, 0, 1, 1], [], []>} : vector<8x32xf32>, vector<32x128xf32>, vector<8x128xf32> -> vector<8x128xf32>
    %18 = arith.negf %17 : vector<8x128xf32>
    %19 = math.exp %18 : vector<8x128xf32>
    %cst_16 = arith.constant 1.000000e+00 : f32
    %20 = vector.broadcast %cst_16 : f32 to vector<8x128xf32>
    %21 = arith.addf %20, %19 : vector<8x128xf32>
    %22 = arith.divf %20, %21 : vector<8x128xf32>
    %cst_17 = arith.constant 9.99999974E-5 : f32
    %cst_18 = arith.constant 0.999899983 : f32
    %23 = vector.broadcast %cst_17 : f32 to vector<8x128xf32>
    %24 = arith.maximumf %23, %22 : vector<8x128xf32>
    %25 = vector.broadcast %cst_18 : f32 to vector<8x128xf32>
    %26 = arith.minimumf %25, %24 : vector<8x128xf32>
    %cst_19 = arith.constant 1.000000e+00 : f32
    %27 = vector.broadcast %cst_19 : f32 to vector<8x128xf32>
    %28 = arith.subf %27, %26 : vector<8x128xf32>
    %c0_20 = arith.constant 0 : index
    %c0_21 = arith.constant 0 : index
    %c0_22 = arith.constant 0 : index
    %29 = vector.load %arg7[%c0_20, %c0_21, %c0_22] : memref<1x8x128xf32, #tpu.memory_space<vmem>>, vector<1x8x128xf32>
    %30 = vector.shape_cast %29 : vector<1x8x128xf32> to vector<8x128xf32>
    %cst_23 = arith.constant 1.000000e+00 : f32
    %31 = vector.broadcast %cst_23 : f32 to vector<8x128xf32>
    %32 = arith.subf %31, %30 : vector<8x128xf32>
    %33 = arith.mulf %32, %32 : vector<8x128xf32>
    %34 = math.log %28 : vector<8x128xf32>
    %35 = arith.mulf %26, %26 : vector<8x128xf32>
    %36 = arith.mulf %34, %35 : vector<8x128xf32>
    %37 = arith.mulf %33, %33 : vector<8x128xf32>
    %38 = arith.mulf %36, %37 : vector<8x128xf32>
    %c0_24 = arith.constant 0 : index
    %c0_25 = arith.constant 0 : index
    %c0_26 = arith.constant 0 : index
    %39 = vector.load %arg6[%c0_24, %c0_25, %c0_26] : memref<1x8x2xf32, #tpu.memory_space<vmem>>, vector<1x8x2xf32>
    %40 = vector.shape_cast %39 : vector<1x8x2xf32> to vector<8x2xf32>
    %41 = vector.extract_strided_slice %40 {offsets = [0, 0], sizes = [8, 1], strides = [1, 1]} : vector<8x2xf32> to vector<8x1xf32>
    %c0_27 = arith.constant 0 : index
    %c0_28 = arith.constant 0 : index
    %c0_29 = arith.constant 0 : index
    %42 = vector.load %arg6[%c0_27, %c0_28, %c0_29] : memref<1x8x2xf32, #tpu.memory_space<vmem>>, vector<1x8x2xf32>
    %43 = vector.shape_cast %42 : vector<1x8x2xf32> to vector<8x2xf32>
    %44 = vector.extract_strided_slice %43 {offsets = [0, 1], sizes = [8, 1], strides = [1, 1]} : vector<8x2xf32> to vector<8x1xf32>
    %45 = arith.fptosi %44 : vector<8x1xf32> to vector<8x1xi32>
    %46 = tpu.iota {dimensions = array<i32: 1>} : vector<1x128xi32>
    %c128_i32 = arith.constant 128 : i32
    %47 = arith.muli %arg1, %c128_i32 : i32
    %48 = vector.broadcast %47 : i32 to vector<1x128xi32>
    %49 = arith.addi %46, %48 : vector<1x128xi32>
    %50 = vector.broadcast %49 : vector<1x128xi32> to vector<8x128xi32>
    %51 = vector.broadcast %45 : vector<8x1xi32> to vector<8x128xi32>
    %52 = arith.cmpi eq, %50, %51 : vector<8x128xi32>
    %53 = math.log %26 : vector<8x128xf32>
    %54 = arith.mulf %28, %28 : vector<8x128xf32>
    %55 = arith.mulf %53, %54 : vector<8x128xf32>
    %56 = vector.broadcast %41 : vector<8x1xf32> to vector<8x128xf32>
    %57 = arith.mulf %55, %56 : vector<8x128xf32>
    %cst_30 = arith.constant 0.000000e+00 : f32
    %58 = vector.broadcast %cst_30 : f32 to vector<8x128xf32>
    %59 = arith.select %52, %57, %58 : vector<8x128xi1>, vector<8x128xf32>
    %c0_31 = arith.constant 0 : index
    %c0_32 = arith.constant 0 : index
    %c0_33 = arith.constant 0 : index
    %60 = vector.load %arg8[%c0_31, %c0_32, %c0_33] : memref<1x1x1xf32, #tpu.memory_space<vmem>>, vector<1x1x1xf32>
    %61 = arith.addf %38, %59 : vector<8x128xf32>
    %62 = vector.shape_cast %61 : vector<8x128xf32> to vector<1x8x128xf32>
    %cst_34 = arith.constant dense<0.000000e+00> : vector<1xf32>
    %63 = vector.multi_reduction <add>, %62, %cst_34 [1, 2] : vector<1x8x128xf32> to vector<1xf32>
    %64 = vector.shape_cast %63 : vector<1xf32> to vector<1x1x1xf32>
    %65 = vector.extract %64[0, 0, 0] : f32 from vector<1x1x1xf32>
    %66 = vector.broadcast %65 : f32 to vector<1x1x1xf32>
    %67 = arith.addf %60, %66 : vector<1x1x1xf32>
    %c0_35 = arith.constant 0 : index
    %c0_36 = arith.constant 0 : index
    %c0_37 = arith.constant 0 : index
    %68 = vector.load %arg8[%c0_35, %c0_36, %c0_37] : memref<1x1x1xf32, #tpu.memory_space<vmem>>, vector<1x1x1xf32>
    tpu.vector_store %arg8[%c0_35, %c0_36, %c0_37], %67 {strides = array<i32>} : memref<1x1x1xf32, #tpu.memory_space<vmem>>, vector<1x1x1xf32>,
    return
  }
  func.func @transform_0(%arg0: i32, %arg1: i32) -> (i32, i32, i32) {
    %c0_i32 = arith.constant 0 : i32
    %c0_i32_0 = arith.constant 0 : i32
    return %arg0, %c0_i32, %arg1 : i32, i32, i32
  }
  func.func @transform_1(%arg0: i32, %arg1: i32) -> (i32, i32, i32) {
    %c0_i32 = arith.constant 0 : i32
    %c0_i32_0 = arith.constant 0 : i32
    %c0_i32_1 = arith.constant 0 : i32
    return %arg0, %c0_i32, %c0_i32_0 : i32, i32, i32
  }
  func.func @transform_2(%arg0: i32, %arg1: i32) -> (i32, i32, i32) {
    %c0_i32 = arith.constant 0 : i32
    %c0_i32_0 = arith.constant 0 : i32
    %c0_i32_1 = arith.constant 0 : i32
    return %arg0, %c0_i32, %c0_i32_0 : i32, i32, i32
  }
  func.func @transform_3(%arg0: i32, %arg1: i32) -> (i32, i32, i32) {
    %c0_i32 = arith.constant 0 : i32
    %c0_i32_0 = arith.constant 0 : i32
    %c0_i32_1 = arith.constant 0 : i32
    return %arg0, %c0_i32, %c0_i32_0 : i32, i32, i32
  }
  func.func @transform_4(%arg0: i32, %arg1: i32) -> (i32, i32, i32) {
    %c0_i32 = arith.constant 0 : i32
    %c0_i32_0 = arith.constant 0 : i32
    %c0_i32_1 = arith.constant 0 : i32
    return %arg0, %c0_i32, %c0_i32_0 : i32, i32, i32
  }
  func.func @transform_5(%arg0: i32, %arg1: i32) -> (i32, i32, i32) {
    %c0_i32 = arith.constant 0 : i32
    %c0_i32_0 = arith.constant 0 : i32
    return %arg0, %c0_i32, %arg1 : i32, i32, i32
  }
  func.func @transform_6(%arg0: i32, %arg1: i32) -> (i32, i32, i32) {
    %c0_i32 = arith.constant 0 : i32
    %c0_i32_0 = arith.constant 0 : i32
    %c0_i32_1 = arith.constant 0 : i32
    return %arg0, %c0_i32, %c0_i32_0 : i32, i32, i32
  }
}

</mosaic_0001>

<llo_original>
// kernel: tpu_custom_call.1
$region0: #{tpu_custom_call.1}
  #allocation0 [shape = 'u32[]', space=smem, size = 0x4, offset = 0x4, fixed_abs, tag = 'smem constant byte address 0x4 - core index']
  #allocation1 [shape = 'u32[144,128]{1,0:T(1,128)}', space=vmem, size = 0x12000, scoped, tag = 'internal scratch']
  %s0 = inlined_call_operand.vmem [shape: f32[2,8,256], index: 0, kind: input, shape index: {}]
  %s1 = inlined_call_operand.vmem [shape: f32[2,32,8], index: 1, kind: input, shape index: {}]
  %s2 = inlined_call_operand.vmem [shape: f32[2,32,32], index: 2, kind: input, shape index: {}]
  %s3 = inlined_call_operand.hbm [shape: f32[2,8,32], index: 3, kind: input, shape index: {}]
  %s4 = inlined_call_operand.vmem [shape: f32[2,8,2], index: 4, kind: input, shape index: {}]
  %s5 = inlined_call_operand.hbm [shape: f32[2,8,256], index: 5, kind: input, shape index: {}]
  %s6 = inlined_call_operand.vmem [shape: f32[2,1,1], index: 6, kind: output, shape index: {}]
  %s7 = sld [smem:[#allocation0]]
  $region69: #{tpu_custom_call.1} parent=0
    _
  %s9 = ssub.s32 1, %s7
  %s10 = scalar_select 0, %s9, %s7
  $region1: #{tpu_custom_call.1} parent=0
    #allocation2 [shape = 'u8[8192]{0}', space=vmem, size = 0x2000, scoped, tag = 'input window, operand 3']
    #allocation3 [shape = 's32[2]{0}', space=sflag, size = 0x8, scoped, tag = 'scoped memory for tpu_custom_call.1']
    #allocation4 [shape = 'u8[8192]{0}', space=vmem, size = 0x2000, scoped, tag = 'input window, operand 5']
    #allocation5 [shape = 's32[2]{0}', space=sflag, size = 0x8, scoped, tag = 'scoped memory for tpu_custom_call.1']
    %11 = vsyncpa [#allocation3], 0
    %s12 = scalar_lea.sflag [#allocation3], 1
    %13 = vsyncpa %s12, 0
    %14 = vsyncpa [#allocation5], 0
    %s15 = scalar_lea.sflag [#allocation5], 1
    %16 = vsyncpa %s15, 0
    loop: start=0, step=1, limit=6
    $region2: #{tpu_custom_call.1} parent=1 // loop_pre_header
      _
    $region3: #{tpu_custom_call.1} parent=1 // loop_header
      %s18 = sphi 0, %s22
      %p19 = scmp.ge.s32.totalorder %s18, 6
      %s25 = sphi 0, %s37
      %s26 = sphi 0, %s33
      %s27 = sphi 0, %s25
      %s28 = sphi 0, %s26
      %s29 = sphi 0, %s27
      %s30 = sphi 0, %s28
      %s42 = sphi 0, %s44
      %s45 = sphi 0, %s42
      %s46 = sphi 0, %s45
      %s62 = sphi 0, %s46
      %s68 = sphi 0, %s70
      %s71 = sphi 0, %s68
      %s72 = sphi 0, %s71
      %s88 = sphi 0, %s72
      %s94 = sphi 0, %s96
      %s97 = sphi 0, %s94
      %s98 = sphi 0, %s97
      %s114 = sphi 0, %s98
      %s120 = sphi 0, %s122
      %s123 = sphi 0, %s120
      %s124 = sphi 0, %s123
      %s140 = sphi 0, %s124
      %s146 = sphi 0, %s148
      %s149 = sphi 0, %s146
      %s150 = sphi 0, %s149
      %s166 = sphi 0, %s150
      %s174 = sphi 0, %s176
      %s177 = sphi 0, %s174
      %s178 = sphi 0, %s177
      %s194 = sphi 0, %s178
      %s200 = sphi 0, %s202
      %s203 = sphi 0, %s200
      %s204 = sphi 0, %s203
      %s220 = sphi 0, %s204
    $region4: #{tpu_custom_call.1} parent=1 // loop_header_branch
      %21 = sbr.rel (%p19) target = $region8
    $region5: #{tpu_custom_call.1} parent=1 // loop_body
      %s23 = ssub.s32 %s18, 1
      %s24 = ssub.s32 %s18, 2
      %s31 = sadd.s32 1, %s26
      %p32 = scmp.ge.s32.totalorder %s31, 2
      %s33 = scalar_select %p32, 0, %s31
      %s34 = sadd.s32 1, %s25
      %s35 = scalar_select %p32, %s34, %s25
      %p36 = scmp.ge.s32.totalorder %s35, 2
      %s37 = scalar_select %p36, 0, %s35
      %s38 = ssub.s32 %s25, %s37
      %s39 = ssub.s32 %s26, %s33
      %s40 = sor.u32 %s38, %s39
      %p41 = scmp.eq.s32.totalorder %s40, 0
      %s43 = sadd.s32 %s42, 1
      %s44 = scalar_select %p41, %s42, %s43
      %p47 = pneg %p41
      %p48 = scmp.eq.s32.totalorder %s18, 3
      %p49 = por %p47, %p48
      %p50 = scmp.ne.s32.totalorder %s42, %s45
      %p51 = scmp.eq.s32.totalorder %s18, 0
      %p52 = por %p50, %p51
      %p53 = scmp.ne.s32.totalorder %s42, %s45
      %p54 = scmp.eq.s32.totalorder %s23, 3
      %p55 = por %p53, %p54
      %p56 = scmp.ne.s32.totalorder %s45, %s46
      %p57 = scmp.eq.s32.totalorder %s23, 0
      %p58 = por %p56, %p57
      %p59 = scmp.ne.s32.totalorder %s45, %s46
      %p60 = scmp.eq.s32.totalorder %s24, 3
      %p61 = por %p59, %p60
      %p63 = scmp.ne.s32.totalorder %s46, %s62
      %p64 = scmp.eq.s32.totalorder %s24, 0
      %p65 = por %p63, %p64
      %s66 = ssub.s32 %s25, %s37
      %p67 = scmp.eq.s32.totalorder %s66, 0
      %s69 = sadd.s32 %s68, 1
      %s70 = scalar_select %p67, %s68, %s69
      %p73 = pneg %p67
      %p74 = scmp.eq.s32.totalorder %s18, 3
      %p75 = por %p73, %p74
      %p76 = scmp.ne.s32.totalorder %s68, %s71
      %p77 = scmp.eq.s32.totalorder %s18, 0
      %p78 = por %p76, %p77
      %p79 = scmp.ne.s32.totalorder %s68, %s71
      %p80 = scmp.eq.s32.totalorder %s23, 3
      %p81 = por %p79, %p80
      %p82 = scmp.ne.s32.totalorder %s71, %s72
      %p83 = scmp.eq.s32.totalorder %s23, 0
      %p84 = por %p82, %p83
      %p85 = scmp.ne.s32.totalorder %s71, %s72
      %p86 = scmp.eq.s32.totalorder %s24, 3
      %p87 = por %p85, %p86
      %p89 = scmp.ne.s32.totalorder %s72, %s88
      %p90 = scmp.eq.s32.totalorder %s24, 0
      %p91 = por %p89, %p90
      %s92 = ssub.s32 %s25, %s37
      %p93 = scmp.eq.s32.totalorder %s92, 0
      %s95 = sadd.s32 %s94, 1
      %s96 = scalar_select %p93, %s94, %s95
      %p99 = pneg %p93
      %p100 = scmp.eq.s32.totalorder %s18, 3
      %p101 = por %p99, %p100
      %p102 = scmp.ne.s32.totalorder %s94, %s97
      %p103 = scmp.eq.s32.totalorder %s18, 0
      %p104 = por %p102, %p103
      %p105 = scmp.ne.s32.totalorder %s94, %s97
      %p106 = scmp.eq.s32.totalorder %s23, 3
      %p107 = por %p105, %p106
      %p108 = scmp.ne.s32.totalorder %s97, %s98
      %p109 = scmp.eq.s32.totalorder %s23, 0
      %p110 = por %p108, %p109
      %p111 = scmp.ne.s32.totalorder %s97, %s98
      %p112 = scmp.eq.s32.totalorder %s24, 3
      %p113 = por %p111, %p112
      %p115 = scmp.ne.s32.totalorder %s98, %s114
      %p116 = scmp.eq.s32.totalorder %s24, 0
      %p117 = por %p115, %p116
      %s118 = ssub.s32 %s25, %s37
      %p119 = scmp.eq.s32.totalorder %s118, 0
      %s121 = sadd.s32 %s120, 1
      %s122 = scalar_select %p119, %s120, %s121
      %p125 = pneg %p119
      %p126 = scmp.eq.s32.totalorder %s18, 3
      %p127 = por %p125, %p126
      %p128 = scmp.ne.s32.totalorder %s120, %s123
      %p129 = scmp.eq.s32.totalorder %s18, 0
      %p130 = por %p128, %p129
      %p131 = scmp.ne.s32.totalorder %s120, %s123
      %p132 = scmp.eq.s32.totalorder %s23, 3
      %p133 = por %p131, %p132
      %p134 = scmp.ne.s32.totalorder %s123, %s124
      %p135 = scmp.eq.s32.totalorder %s23, 0
      %p136 = por %p134, %p135
      %p137 = scmp.ne.s32.totalorder %s123, %s124
      %p138 = scmp.eq.s32.totalorder %s24, 3
      %p139 = por %p137, %p138
      %p141 = scmp.ne.s32.totalorder %s124, %s140
      %p142 = scmp.eq.s32.totalorder %s24, 0
      %p143 = por %p141, %p142
      %s144 = ssub.s32 %s25, %s37
      %p145 = scmp.eq.s32.totalorder %s144, 0
      %s147 = sadd.s32 %s146, 1
      %s148 = scalar_select %p145, %s146, %s147
      %p151 = pneg %p145
      %p152 = scmp.eq.s32.totalorder %s18, 3
      %p153 = por %p151, %p152
      %p154 = scmp.ne.s32.totalorder %s146, %s149
      %p155 = scmp.eq.s32.totalorder %s18, 0
      %p156 = por %p154, %p155
      %p157 = scmp.ne.s32.totalorder %s146, %s149
      %p158 = scmp.eq.s32.totalorder %s23, 3
      %p159 = por %p157, %p158
      %p160 = scmp.ne.s32.totalorder %s149, %s150
      %p161 = scmp.eq.s32.totalorder %s23, 0
      %p162 = por %p160, %p161
      %p163 = scmp.ne.s32.totalorder %s149, %s150
      %p164 = scmp.eq.s32.totalorder %s24, 3
      %p165 = por %p163, %p164
      %p167 = scmp.ne.s32.totalorder %s150, %s166
      %p168 = scmp.eq.s32.totalorder %s24, 0
      %p169 = por %p167, %p168
      %s170 = ssub.s32 %s25, %s37
      %s171 = ssub.s32 %s26, %s33
      %s172 = sor.u32 %s170, %s171
      %p173 = scmp.eq.s32.totalorder %s172, 0
      %s175 = sadd.s32 %s174, 1
      %s176 = scalar_select %p173, %s174, %s175
      %p179 = pneg %p173
      %p180 = scmp.eq.s32.totalorder %s18, 3
      %p181 = por %p179, %p180
      %p182 = scmp.ne.s32.totalorder %s174, %s177
      %p183 = scmp.eq.s32.totalorder %s18, 0
      %p184 = por %p182, %p183
      %p185 = scmp.ne.s32.totalorder %s174, %s177
      %p186 = scmp.eq.s32.totalorder %s23, 3
      %p187 = por %p185, %p186
      %p188 = scmp.ne.s32.totalorder %s177, %s178
      %p189 = scmp.eq.s32.totalorder %s23, 0
      %p190 = por %p188, %p189
      %p191 = scmp.ne.s32.totalorder %s177, %s178
      %p192 = scmp.eq.s32.totalorder %s24, 3
      %p193 = por %p191, %p192
      %p195 = scmp.ne.s32.totalorder %s178, %s194
      %p196 = scmp.eq.s32.totalorder %s24, 0
      %p197 = por %p195, %p196
      %s198 = ssub.s32 %s25, %s37
      %p199 = scmp.eq.s32.totalorder %s198, 0
      %s201 = sadd.s32 %s200, 1
      %s202 = scalar_select %p199, %s200, %s201
      %p205 = pneg %p199
      %p206 = scmp.eq.s32.totalorder %s18, 3
      %p207 = por %p205, %p206
      %p208 = scmp.ne.s32.totalorder %s200, %s203
      %p209 = scmp.eq.s32.totalorder %s18, 0
      %p210 = por %p208, %p209
      %p211 = scmp.ne.s32.totalorder %s200, %s203
      %p212 = scmp.eq.s32.totalorder %s23, 3
      %p213 = por %p211, %p212
      %p214 = scmp.ne.s32.totalorder %s203, %s204
      %p215 = scmp.eq.s32.totalorder %s23, 0
      %p216 = por %p214, %p215
      %p217 = scmp.ne.s32.totalorder %s203, %s204
      %p218 = scmp.eq.s32.totalorder %s24, 3
      %p219 = por %p217, %p218
      %p221 = scmp.ne.s32.totalorder %s204, %s220
      %p222 = scmp.eq.s32.totalorder %s24, 0
      %p223 = por %p221, %p222
      %p224 = scmp.le.s32.totalorder 1, %s18
      %p225 = scmp.lt.s32.totalorder %s18, 5
      %p226 = pnand %p224, %p225
      %p227 = pneg %p226
      // Predicated region
      $region9: #{tpu_custom_call.1} parent=5 // pred_check
        _
      $region10: #{tpu_custom_call.1} parent=5 // pred_check_branch
        %229 = sbr.rel (%p226) target = $region12
      $region11: #{tpu_custom_call.1} parent=5 // pred_region
        %s230 = ssub.s32 %s18, 1
      $region12: #{tpu_custom_call.1} parent=5 // pred_fallthru
        _
      %p231 = scmp.lt.s32.totalorder %s18, 4
      // Predicated region
      $region13: #{tpu_custom_call.1} parent=5 // pred_check
        %p232 = pneg %p231
      $region14: #{tpu_custom_call.1} parent=5 // pred_check_branch
        %234 = sbr.rel (%p232) target = $region16
      $region15: #{tpu_custom_call.1} parent=5 // pred_region
        // Predicated region
        $region17: #{tpu_custom_call.1} parent=15 // pred_check
          %p235 = pneg %p52
        $region18: #{tpu_custom_call.1} parent=15 // pred_check_branch
          %237 = sbr.rel (%p235) target = $region20
        $region19: #{tpu_custom_call.1} parent=15 // pred_region
          %p238 = scmp.lt.s32.totalorder %s25, 1
          %s239 = scalar_select %p238, %s25, 1
          %p240 = scmp.lt.s32.totalorder %s26, 1
          %s241 = scalar_select %p240, %s26, 1
          %s242 = smul.addr %s239, 2
          %s243 = sadd.s32 %s241, %s242
          %s244 = smul.addr %s243, 8
          %s245 = scalar_lea.vmem %s0, %s244
        $region20: #{tpu_custom_call.1} parent=15 // pred_fallthru
          _
        // Predicated region
        $region21: #{tpu_custom_call.1} parent=15 // pred_check
          %p246 = pneg %p78
        $region22: #{tpu_custom_call.1} parent=15 // pred_check_branch
          %248 = sbr.rel (%p246) target = $region24
        $region23: #{tpu_custom_call.1} parent=15 // pred_region
          %p249 = scmp.lt.s32.totalorder %s25, 1
          %s250 = scalar_select %p249, %s25, 1
          %s251 = smul.addr %s250, 4
          %s252 = smul.addr %s251, 8
          %s253 = scalar_lea.vmem %s1, %s252
        $region24: #{tpu_custom_call.1} parent=15 // pred_fallthru
          _
        // Predicated region
        $region25: #{tpu_custom_call.1} parent=15 // pred_check
          %p254 = pneg %p104
        $region26: #{tpu_custom_call.1} parent=15 // pred_check_branch
          %256 = sbr.rel (%p254) target = $region28
        $region27: #{tpu_custom_call.1} parent=15 // pred_region
          %p257 = scmp.lt.s32.totalorder %s25, 1
          %s258 = scalar_select %p257, %s25, 1
          %s259 = smul.addr %s258, 4
          %s260 = smul.addr %s259, 8
          %s261 = scalar_lea.vmem %s2, %s260
        $region28: #{tpu_custom_call.1} parent=15 // pred_fallthru
          _
        // Predicated region
        $region29: #{tpu_custom_call.1} parent=15 // pred_check
          %p262 = pneg %p130
        $region30: #{tpu_custom_call.1} parent=15 // pred_check_branch
          %264 = sbr.rel (%p262) target = $region32
        $region31: #{tpu_custom_call.1} parent=15 // pred_region
          %s265 = sand.u32 %s120, 1
          %s266 = scalar_lea.sflag [#allocation3], %s265
          %s267 = sand.u32 %s120, 1
          %s268 = smul.addr %s267, 8
          %s269 = scalar_lea.vmem [#allocation2], %s268
          %s271 = ssub.s32 128, 128
          %272 = vsyncadd %s266, %s271
          %s273 = smul.addr %s25, 128
          %s274 = scalar_lea.hbm %s3, %s273
          %s276 = sshll.u32 %s269, 4
          %s277 = int_to_ptr.vmem [resolvable:$true] %s276
          %279 = dma.hbm_to_vmem [thread:$0]  %s274, 128, %s277, %s266
        $region32: #{tpu_custom_call.1} parent=15 // pred_fallthru
          _
        // Predicated region
        $region33: #{tpu_custom_call.1} parent=15 // pred_check
          %p280 = pneg %p156
        $region34: #{tpu_custom_call.1} parent=15 // pred_check_branch
          %282 = sbr.rel (%p280) target = $region36
        $region35: #{tpu_custom_call.1} parent=15 // pred_region
          %p283 = scmp.lt.s32.totalorder %s25, 1
          %s284 = scalar_select %p283, %s25, 1
          %s285 = smul.addr %s284, 8
          %s286 = scalar_lea.vmem %s4, %s285
        $region36: #{tpu_custom_call.1} parent=15 // pred_fallthru
          _
        // Predicated region
        $region37: #{tpu_custom_call.1} parent=15 // pred_check
          %p287 = pneg %p184
        $region38: #{tpu_custom_call.1} parent=15 // pred_check_branch
          %289 = sbr.rel (%p287) target = $region40
        $region39: #{tpu_custom_call.1} parent=15 // pred_region
          %s290 = sand.u32 %s174, 1
          %s291 = scalar_lea.sflag [#allocation5], %s290
          %s292 = sand.u32 %s174, 1
          %s293 = smul.addr %s292, 8
          %s294 = scalar_lea.vmem [#allocation4], %s293
          %s296 = ssub.s32 128, 128
          %297 = vsyncadd %s291, %s296
          %s298 = smul.addr %s25, 2
          %s299 = sadd.s32 %s26, %s298
          %s300 = smul.addr %s299, 128
          %s301 = scalar_lea.hbm %s5, %s300
          %s303 = sshll.u32 %s294, 4
          %s304 = int_to_ptr.vmem [resolvable:$true] %s303
          %306 = dma.hbm_to_vmem [thread:$0]  %s301, 128, %s304, %s291
        $region40: #{tpu_custom_call.1} parent=15 // pred_fallthru
          _
      $region16: #{tpu_custom_call.1} parent=5 // pred_fallthru
        _
      %p307 = scmp.le.s32.totalorder 1, %s18
      %p308 = scmp.lt.s32.totalorder %s18, 5
      %p309 = pnand %p307, %p308
      %p310 = pneg %p309
      // Predicated region
      $region41: #{tpu_custom_call.1} parent=5 // pred_check
        _
      $region42: #{tpu_custom_call.1} parent=5 // pred_check_branch
        %312 = sbr.rel (%p309) target = $region44
      $region43: #{tpu_custom_call.1} parent=5 // pred_region
        %s313 = ssub.s32 %s18, 1
        %s314 = sand.u32 %s123, 1
        %s315 = scalar_lea.sflag [#allocation3], %s314
        %s316 = sand.u32 %s123, 1
        %s317 = smul.addr %s316, 8
        %s318 = scalar_lea.vmem [#allocation2], %s317
        // Predicated region
        $region45: #{tpu_custom_call.1} parent=43 // pred_check
          %p319 = pneg %p136
        $region46: #{tpu_custom_call.1} parent=43 // pred_check_branch
          %321 = sbr.rel (%p319) target = $region48
        $region47: #{tpu_custom_call.1} parent=43 // pred_region
          %322 = dma.done %s315, 128
        $region48: #{tpu_custom_call.1} parent=43 // pred_fallthru
          _
        %s323 = sand.u32 %s177, 1
        %s324 = scalar_lea.sflag [#allocation5], %s323
        %s325 = sand.u32 %s177, 1
        %s326 = smul.addr %s325, 8
        %s327 = scalar_lea.vmem [#allocation4], %s326
        // Predicated region
        $region49: #{tpu_custom_call.1} parent=43 // pred_check
          %p328 = pneg %p190
        $region50: #{tpu_custom_call.1} parent=43 // pred_check_branch
          %330 = sbr.rel (%p328) target = $region52
        $region51: #{tpu_custom_call.1} parent=43 // pred_region
          %331 = dma.done %s324, 128
        $region52: #{tpu_custom_call.1} parent=43 // pred_fallthru
          _
        %p332 = scmp.lt.s32.totalorder %s27, 1
        %s333 = scalar_select %p332, %s27, 1
        %p334 = scmp.lt.s32.totalorder %s28, 1
        %s335 = scalar_select %p334, %s28, 1
        %s336 = smul.addr %s333, 2
        %s337 = sadd.s32 %s335, %s336
        %s338 = smul.addr %s337, 8
        %s339 = scalar_lea.vmem %s0, %s338
        %p340 = pneg %p58
        %p341 = pneg %p55
        %p342 = scmp.lt.s32.totalorder %s27, 1
        %s343 = scalar_select %p342, %s27, 1
        %s344 = smul.addr %s343, 4
        %s345 = smul.addr %s344, 8
        %s346 = scalar_lea.vmem %s1, %s345
        %p347 = pneg %p84
        %p348 = pneg %p81
        %p349 = scmp.lt.s32.totalorder %s27, 1
        %s350 = scalar_select %p349, %s27, 1
        %s351 = smul.addr %s350, 4
        %s352 = smul.addr %s351, 8
        %s353 = scalar_lea.vmem %s2, %s352
        %p354 = pneg %p110
        %p355 = pneg %p107
        %s356 = sand.u32 %s123, 1
        %s357 = scalar_lea.sflag [#allocation3], %s356
        %s358 = sand.u32 %s123, 1
        %s359 = smul.addr %s358, 8
        %s360 = scalar_lea.vmem [#allocation2], %s359
        %p361 = pneg %p136
        %p362 = pneg %p133
        %p363 = scmp.lt.s32.totalorder %s27, 1
        %s364 = scalar_select %p363, %s27, 1
        %s365 = smul.addr %s364, 8
        %s366 = scalar_lea.vmem %s4, %s365
        %p367 = pneg %p162
        %p368 = pneg %p159
        %s369 = sand.u32 %s177, 1
        %s370 = scalar_lea.sflag [#allocation5], %s369
        %s371 = sand.u32 %s177, 1
        %s372 = smul.addr %s371, 8
        %s373 = scalar_lea.vmem [#allocation4], %s372
        %p374 = pneg %p190
        %p375 = pneg %p187
        %p376 = pneg %p216
        %p377 = pneg %p213
        %p378 = scmp.lt.s32.totalorder %s27, 1
        %s379 = scalar_select %p378, %s27, 1
        %s380 = scalar_lea.vmem %s6, %s379
        %p381 = scmp.lt.s32.totalorder %s27, 1
        %s382 = scalar_select %p381, %s27, 1
        %p383 = scmp.lt.s32.totalorder %s28, 1
        %s384 = scalar_select %p383, %s28, 1
        %s385 = smul.addr %s382, 2
        %s386 = sadd.s32 %s384, %s385
        %s387 = smul.addr %s386, 8
        %s388 = scalar_lea.vmem %s0, %s387
        %p389 = scmp.lt.s32.totalorder %s27, 1
        %s390 = scalar_select %p389, %s27, 1
        %s391 = smul.addr %s390, 4
        %s392 = smul.addr %s391, 8
        %s393 = scalar_lea.vmem %s1, %s392
        %p394 = scmp.lt.s32.totalorder %s27, 1
        %s395 = scalar_select %p394, %s27, 1
        %s396 = smul.addr %s395, 4
        %s397 = smul.addr %s396, 8
        %s398 = scalar_lea.vmem %s2, %s397
        %p399 = scmp.lt.s32.totalorder %s27, 1
        %s400 = scalar_select %p399, %s27, 1
        %s401 = smul.addr %s400, 8
        %s402 = scalar_lea.vmem %s4, %s401
        %p403 = scmp.lt.s32.totalorder %s27, 1
        %s404 = scalar_select %p403, %s27, 1
        %s405 = scalar_lea.vmem %s6, %s404
        %p406 = scmp.eq.s32.totalorder %s28, 0
        // Predicated region
        $region53: #{tpu_custom_call.1} parent=43 // pred_check
          %p407 = pneg %p406
        $region54: #{tpu_custom_call.1} parent=43 // pred_check_branch
          %409 = sbr.rel (%p407) target = $region56
        $region55: #{tpu_custom_call.1} parent=43 // pred_region
          %vm410 = vcmask 0
          %411 = vst.msk [vmem:[%s405] sm:$0x1] %vm410, 0.0
        $region56: #{tpu_custom_call.1} parent=43 // pred_fallthru
          _
        %v412 = vld [vmem:[%s393] sm:$0xff]
        %v413 = vld [vmem:[%s393 + $0x8] sm:$0xff]
        %v414 = vld [vmem:[%s393 + $0x10] sm:$0xff]
        %v415 = vld [vmem:[%s393 + $0x18] sm:$0xff]
        %v416 = vld [vmem:[%s388] sm:$0xff]
        %vm417 = vcmask 64512
        %v419 = vsel %vm417, %v412, 0
        %v422 = vsel %vm417, %v413, 0
        %v425 = vsel %vm417, %v414, 0
        %v428 = vsel %vm417, %v415, 0
        %430 = vmatprep.subr.mxu0 0.0
        %431 = vmatpush1.msra.mxu0 %v416
        %432 = vmatprep.subr.mxu0 0.0
        %433 = vmatpush1.msra.mxu0 0.0
        %434 = vmatprep.subr.mxu0 0.0
        %435 = vmatpush1.msra.mxu0 0.0
        %436 = vmatprep.subr.mxu0 0.0
        %437 = vmatpush1.msra.mxu0 0.0
        %438 = vmatprep.subr.mxu0 0.0
        %439 = vmatpush1.msra.mxu0 0.0
        %440 = vmatprep.subr.mxu0 0.0
        %441 = vmatpush1.msra.mxu0 0.0
        %442 = vmatprep.subr.mxu0 0.0
        %443 = vmatpush1.msra.mxu0 0.0
        %444 = vmatprep.subr.mxu0 0.0
        %445 = vmatpush1.msra.mxu0 0.0
        %446 = vmatprep.subr.mxu0 0.0
        %447 = vmatpush1.msra.mxu0 0.0
        %448 = vmatprep.subr.mxu0 0.0
        %449 = vmatpush1.msra.mxu0 0.0
        %450 = vmatprep.subr.mxu0 0.0
        %451 = vmatpush1.msra.mxu0 0.0
        %452 = vmatprep.subr.mxu0 0.0
        %453 = vmatpush1.msra.mxu0 0.0
        %454 = vmatprep.subr.mxu0 0.0
        %455 = vmatpush1.msra.mxu0 0.0
        %456 = vmatprep.subr.mxu0 0.0
        %457 = vmatpush1.msra.mxu0 0.0
        %458 = vmatprep.subr.mxu0 0.0
        %459 = vmatpush1.msra.mxu0 0.0
        %460 = vmatprep.subr.mxu0 0.0
        %461 = vmatpush1.msra.mxu0 0.0
        %462 = vmatprep.subr.mxu0 0.0
        %463 = vmatpush1.msra.mxu0 0.0
        %464 = vmatprep.subr.mxu0 0.0
        %465 = vmatpush1.msra.mxu0 0.0
        %466 = vmatprep.subr.mxu0 0.0
        %467 = vmatpush1.msra.mxu0 0.0
        %468 = vmatprep.subr.mxu0 0.0
        %469 = vmatpush1.msra.mxu0 0.0
        %470 = vmatprep.subr.mxu0 0.0
        %471 = vmatpush1.msra.mxu0 0.0
        %472 = vmatprep.subr.mxu0 0.0
        %473 = vmatpush1.msra.mxu0 0.0
        %474 = vmatprep.subr.mxu0 0.0
        %475 = vmatpush1.msra.mxu0 0.0
        %476 = vmatprep.subr.mxu0 0.0
        %477 = vmatpush1.msra.mxu0 0.0
        %478 = vmatprep.subr.mxu0 0.0
        %479 = vmatpush1.msra.mxu0 0.0
        %480 = vmatprep.subr.mxu0 0.0
        %481 = vmatpush1.msra.mxu0 0.0
        %482 = vmatprep.subr.mxu0 0.0
        %483 = vmatpush1.msra.mxu0 0.0
        %484 = vmatprep.subr.mxu0 0.0
        %485 = vmatpush1.msra.mxu0 0.0
        %486 = vmatprep.subr.mxu0 0.0
        %487 = vmatpush1.msra.mxu0 0.0
        %488 = vmatprep.subr.mxu0 0.0
        %489 = vmatpush1.msra.mxu0 0.0
        %490 = vmatprep.subr.mxu0 0.0
        %491 = vmatpush1.msra.mxu0 0.0
        %492 = vmatprep.subr.mxu0 0.0
        %493 = vmatpush1.msra.mxu0 0.0
        %494 = vmatprep.mubr.f32.mxu0 0.0
        %495 = vmatmul.mubr.f32.gmra.mrb[0].mxu0 %v419
        %v496 = vpop.f32.mrb[0].mxu0
        %v497 = vadd.f32 0.0, %v496
        %v498 = vpop.f32.mrb[0].mxu0
        %499 = vmatprep.mubr.f32.mxu0 0.0
        %500 = vmatmul.mubr.f32.gmra.mrb[0].mxu0 %v422
        %v501 = vpop.f32.mrb[0].mxu0
        %v502 = vadd.f32 0.0, %v501
        %v503 = vpop.f32.mrb[0].mxu0
        %504 = vmatprep.mubr.f32.mxu0 0.0
        %505 = vmatmul.mubr.f32.gmra.mrb[0].mxu0 %v425
        %v506 = vpop.f32.mrb[0].mxu0
        %v507 = vadd.f32 0.0, %v506
        %v508 = vpop.f32.mrb[0].mxu0
        %509 = vmatprep.mubr.f32.mxu0 0.0
        %510 = vmatmul.mubr.f32.gmra.mrb[0].mxu0 %v428
        %v511 = vpop.f32.mrb[0].mxu0
        %v512 = vadd.f32 0.0, %v511
        %v513 = vpop.f32.mrb[0].mxu0
        %514 = vdwg.mxu0
        %v515 = vmax.f32 %v497, 0.0
        %v516 = vmax.f32 %v502, 0.0
        %v517 = vmax.f32 %v507, 0.0
        %v518 = vmax.f32 %v512, 0.0
        %v519 = vld [vmem:[%s398] sm:$0xff]
        %v520 = vld [vmem:[%s398 + $0x8] sm:$0xff]
        %v521 = vld [vmem:[%s398 + $0x10] sm:$0xff]
        %v522 = vld [vmem:[%s398 + $0x18] sm:$0xff]
        %vm523 = vcmask 261120
        %v525 = vsel %vm523, %v519, 0
        %v528 = vsel %vm523, %v520, 0
        %v531 = vsel %vm523, %v521, 0
        %v534 = vsel %vm523, %v522, 0
        %536 = vmatprep.subr.mxu0 0.0
        %537 = vmatpush1.msra.mxu0 %v515
        %538 = vmatprep.subr.mxu0 0.0
        %539 = vmatpush1.msra.mxu0 %v516
        %540 = vmatprep.subr.mxu0 0.0
        %541 = vmatpush1.msra.mxu0 %v517
        %542 = vmatprep.subr.mxu0 0.0
        %543 = vmatpush1.msra.mxu0 %v518
        %544 = vmatprep.subr.mxu0 0.0
        %545 = vmatpush1.msra.mxu0 0.0
        %546 = vmatprep.subr.mxu0 0.0
        %547 = vmatpush1.msra.mxu0 0.0
        %548 = vmatprep.subr.mxu0 0.0
        %549 = vmatpush1.msra.mxu0 0.0
        %550 = vmatprep.subr.mxu0 0.0
        %551 = vmatpush1.msra.mxu0 0.0
        %552 = vmatprep.subr.mxu0 0.0
        %553 = vmatpush1.msra.mxu0 0.0
        %554 = vmatprep.subr.mxu0 0.0
        %555 = vmatpush1.msra.mxu0 0.0
        %556 = vmatprep.subr.mxu0 0.0
        %557 = vmatpush1.msra.mxu0 0.0
        %558 = vmatprep.subr.mxu0 0.0
        %559 = vmatpush1.msra.mxu0 0.0
        %560 = vmatprep.subr.mxu0 0.0
        %561 = vmatpush1.msra.mxu0 0.0
        %562 = vmatprep.subr.mxu0 0.0
        %563 = vmatpush1.msra.mxu0 0.0
        %564 = vmatprep.subr.mxu0 0.0
        %565 = vmatpush1.msra.mxu0 0.0
        %566 = vmatprep.subr.mxu0 0.0
        %567 = vmatpush1.msra.mxu0 0.0
        %568 = vmatprep.subr.mxu0 0.0
        %569 = vmatpush1.msra.mxu0 0.0
        %570 = vmatprep.subr.mxu0 0.0
        %571 = vmatpush1.msra.mxu0 0.0
        %572 = vmatprep.subr.mxu0 0.0
        %573 = vmatpush1.msra.mxu0 0.0
        %574 = vmatprep.subr.mxu0 0.0
        %575 = vmatpush1.msra.mxu0 0.0
        %576 = vmatprep.subr.mxu0 0.0
        %577 = vmatpush1.msra.mxu0 0.0
        %578 = vmatprep.subr.mxu0 0.0
        %579 = vmatpush1.msra.mxu0 0.0
        %580 = vmatprep.subr.mxu0 0.0
        %581 = vmatpush1.msra.mxu0 0.0
        %582 = vmatprep.subr.mxu0 0.0
        %583 = vmatpush1.msra.mxu0 0.0
        %584 = vmatprep.subr.mxu0 0.0
        %585 = vmatpush1.msra.mxu0 0.0
        %586 = vmatprep.subr.mxu0 0.0
        %587 = vmatpush1.msra.mxu0 0.0
        %588 = vmatprep.subr.mxu0 0.0
        %589 = vmatpush1.msra.mxu0 0.0
        %590 = vmatprep.subr.mxu0 0.0
        %591 = vmatpush1.msra.mxu0 0.0
        %592 = vmatprep.subr.mxu0 0.0
        %593 = vmatpush1.msra.mxu0 0.0
        %594 = vmatprep.subr.mxu0 0.0
        %595 = vmatpush1.msra.mxu0 0.0
        %596 = vmatprep.subr.mxu0 0.0
        %597 = vmatpush1.msra.mxu0 0.0
        %598 = vmatprep.subr.mxu0 0.0
        %599 = vmatpush1.msra.mxu0 0.0
        %600 = vmatprep.mubr.f32.mxu0 0.0
        %601 = vmatmul.mubr.f32.gmra.mrb[0].mxu0 %v525
        %v602 = vpop.f32.mrb[0].mxu0
        %v603 = vadd.f32 0.0, %v602
        %v604 = vpop.f32.mrb[0].mxu0
        %605 = vmatprep.mubr.f32.mxu0 0.0
        %606 = vmatmul.mubr.f32.gmra.mrb[0].mxu0 %v528
        %v607 = vpop.f32.mrb[0].mxu0
        %v608 = vadd.f32 0.0, %v607
        %v609 = vpop.f32.mrb[0].mxu0
        %610 = vmatprep.mubr.f32.mxu0 0.0
        %611 = vmatmul.mubr.f32.gmra.mrb[0].mxu0 %v531
        %v612 = vpop.f32.mrb[0].mxu0
        %v613 = vadd.f32 0.0, %v612
        %v614 = vpop.f32.mrb[0].mxu0
        %615 = vmatprep.mubr.f32.mxu0 0.0
        %616 = vmatmul.mubr.f32.gmra.mrb[0].mxu0 %v534
        %v617 = vpop.f32.mrb[0].mxu0
        %v618 = vadd.f32 0.0, %v617
        %v619 = vpop.f32.mrb[0].mxu0
        %620 = vdwg.mxu0
        %v621 = vmax.f32 %v603, 0.0
        %v622 = vmax.f32 %v608, 0.0
        %v623 = vmax.f32 %v613, 0.0
        %v624 = vmax.f32 %v618, 0.0
        %v625 = vld [vmem:[%s318] sm:$0xff]
        %v627 = vsel %vm523, %v625, 0
        %629 = vmatprep.subr.mxu0 0.0
        %630 = vmatpush1.msra.mxu0 %v621
        %631 = vmatprep.subr.mxu0 0.0
        %632 = vmatpush1.msra.mxu0 %v622
        %633 = vmatprep.subr.mxu0 0.0
        %634 = vmatpush1.msra.mxu0 %v623
        %635 = vmatprep.subr.mxu0 0.0
        %636 = vmatpush1.msra.mxu0 %v624
        %637 = vmatprep.subr.mxu0 0.0
        %638 = vmatpush1.msra.mxu0 0.0
        %639 = vmatprep.subr.mxu0 0.0
        %640 = vmatpush1.msra.mxu0 0.0
        %641 = vmatprep.subr.mxu0 0.0
        %642 = vmatpush1.msra.mxu0 0.0
        %643 = vmatprep.subr.mxu0 0.0
        %644 = vmatpush1.msra.mxu0 0.0
        %645 = vmatprep.subr.mxu0 0.0
        %646 = vmatpush1.msra.mxu0 0.0
        %647 = vmatprep.subr.mxu0 0.0
        %648 = vmatpush1.msra.mxu0 0.0
        %649 = vmatprep.subr.mxu0 0.0
        %650 = vmatpush1.msra.mxu0 0.0
        %651 = vmatprep.subr.mxu0 0.0
        %652 = vmatpush1.msra.mxu0 0.0
        %653 = vmatprep.subr.mxu0 0.0
        %654 = vmatpush1.msra.mxu0 0.0
        %655 = vmatprep.subr.mxu0 0.0
        %656 = vmatpush1.msra.mxu0 0.0
        %657 = vmatprep.subr.mxu0 0.0
        %658 = vmatpush1.msra.mxu0 0.0
        %659 = vmatprep.subr.mxu0 0.0
        %660 = vmatpush1.msra.mxu0 0.0
        %661 = vmatprep.subr.mxu0 0.0
        %662 = vmatpush1.msra.mxu0 0.0
        %663 = vmatprep.subr.mxu0 0.0
        %664 = vmatpush1.msra.mxu0 0.0
        %665 = vmatprep.subr.mxu0 0.0
        %666 = vmatpush1.msra.mxu0 0.0
        %667 = vmatprep.subr.mxu0 0.0
        %668 = vmatpush1.msra.mxu0 0.0
        %669 = vmatprep.subr.mxu0 0.0
        %670 = vmatpush1.msra.mxu0 0.0
        %671 = vmatprep.subr.mxu0 0.0
        %672 = vmatpush1.msra.mxu0 0.0
        %673 = vmatprep.subr.mxu0 0.0
        %674 = vmatpush1.msra.mxu0 0.0
        %675 = vmatprep.subr.mxu0 0.0
        %676 = vmatpush1.msra.mxu0 0.0
        %677 = vmatprep.subr.mxu0 0.0
        %678 = vmatpush1.msra.mxu0 0.0
        %679 = vmatprep.subr.mxu0 0.0
        %680 = vmatpush1.msra.mxu0 0.0
        %681 = vmatprep.subr.mxu0 0.0
        %682 = vmatpush1.msra.mxu0 0.0
        %683 = vmatprep.subr.mxu0 0.0
        %684 = vmatpush1.msra.mxu0 0.0
        %685 = vmatprep.subr.mxu0 0.0
        %686 = vmatpush1.msra.mxu0 0.0
        %687 = vmatprep.subr.mxu0 0.0
        %688 = vmatpush1.msra.mxu0 0.0
        %689 = vmatprep.subr.mxu0 0.0
        %690 = vmatpush1.msra.mxu0 0.0
        %691 = vmatprep.subr.mxu0 0.0
        %692 = vmatpush1.msra.mxu0 0.0
        %693 = vmatprep.mubr.f32.mxu0 0.0
        %694 = vmatmul.mubr.f32.gmra.mrb[0].mxu0 %v627
        %v695 = vpop.f32.mrb[0].mxu0
        %v696 = vadd.f32 0.0, %v695
        %v697 = vpop.f32.mrb[0].mxu0
        %698 = vdwg.mxu0
        %v699 = vxor.u32 %v696, 2147483648
        %v700 = vmul.f32 %v699, 1.442695
        %v701 = vpow.pop %v700
        %v702 = vadd.f32 %v701, 1.0
        %v703 = vrcp.pop %v702
        %v704 = vmul.f32 1.0, %v703
        %v705 = vmax.f32 %v704, 0.0001
        %v706 = vmin.f32 %v705, 0.9999
        %v707 = vsub.f32 1.0, %v706
        %v708 = vld [vmem:[%s327] sm:$0xff]
        %v709 = vsub.f32 1.0, %v708
        %v710 = vmul.f32 %v709, %v709
        %v711 = vlog2.pop %v707
        %v712 = vmul.f32 %v711, 0.6931472
        %v713 = vmul.f32 %v706, %v706
        %v714 = vmul.f32 %v712, %v713
        %v715 = vmul.f32 %v710, %v710
        %v716 = vmul.f32 %v714, %v715
        %v717 = vld [vmem:[%s402] sm:$0xff]
        %v718 = vcvt.f32.s32.to.zero.pseudo %v717
        %v719 = vlaneseq
        %v720 = vand.u32 %v719, 127
        %s721 = smul.u32 %s28, 128
        %v722 = vstv %s721
        %v723 = vadd.s32 %v720, %v722
        %724 = vset.pattern.permute.xlu0 1
        %725 = vperm.xlu0 %724, %v718
        %v726 = vpop.permute.xlu0 %725
        %vm727 = vcmp.eq.s32.totalorder %v723, %v726
        %v728 = vlog2.pop %v706
        %v729 = vmul.f32 %v728, 0.6931472
        %v730 = vmul.f32 %v707, %v707
        %v731 = vmul.f32 %v729, %v730
        %733 = vset.pattern.permute.xlu0 0
        %734 = vperm.xlu0 %733, %v717
        %v735 = vpop.permute.xlu0 %734
        %v737 = vmul.f32 %v731, %v735
        %v738 = vsel %vm727, %v737, 0.0
        %v739 = vld [vmem:[%s405] sm:$0x1]
        %v740 = vadd.f32 %v716, %v738
        %741 = vadd.xlane.f32.xlu0 %v740
        %v742 = vpop.xlane.xlu0 %741
        %v743 = vrot.slane %v742, 4
        %v744 = vadd.f32 %v742, %v743
        %v745 = vrot.slane %v744, 2
        %v746 = vadd.f32 %v744, %v745
        %v747 = vrot.slane %v746, 1
        %v748 = vadd.f32 %v746, %v747
        %s749 = vtos %v748
        %v750 = vstv %s749
        %v751 = vadd.f32 %v739, %v750
        %vm752 = vcmask 0
        %753 = vst.msk [vmem:[%s405] sm:$0x1] %vm752, %v751
        %p754 = scmp.lt.s32.totalorder %s27, 1
        %s755 = scalar_select %p754, %s27, 1
        %s756 = scalar_lea.vmem %s6, %s755
        // Predicated region
        $region57: #{tpu_custom_call.1} parent=43 // pred_check
          %p757 = pneg %p213
        $region58: #{tpu_custom_call.1} parent=43 // pred_check_branch
          %759 = sbr.rel (%p757) target = $region60
        $region59: #{tpu_custom_call.1} parent=43 // pred_region
          _
        $region60: #{tpu_custom_call.1} parent=43 // pred_fallthru
          _
      $region44: #{tpu_custom_call.1} parent=5 // pred_fallthru
        _
      %p760 = scmp.le.s32.totalorder 2, %s18
      // Predicated region
      $region61: #{tpu_custom_call.1} parent=5 // pred_check
        %p761 = pneg %p760
      $region62: #{tpu_custom_call.1} parent=5 // pred_check_branch
        %763 = sbr.rel (%p761) target = $region64
      $region63: #{tpu_custom_call.1} parent=5 // pred_region
        %s764 = ssub.s32 %s18, 2
        // Predicated region
        $region65: #{tpu_custom_call.1} parent=63 // pred_check
          %p765 = pneg %p219
        $region66: #{tpu_custom_call.1} parent=63 // pred_check_branch
          %767 = sbr.rel (%p765) target = $region68
        $region67: #{tpu_custom_call.1} parent=63 // pred_region
          %p768 = scmp.lt.s32.totalorder %s29, 1
          %s769 = scalar_select %p768, %s29, 1
          %s770 = scalar_lea.vmem %s6, %s769
        $region68: #{tpu_custom_call.1} parent=63 // pred_fallthru
          _
      $region64: #{tpu_custom_call.1} parent=5 // pred_fallthru
        _
    $region6: #{tpu_custom_call.1} parent=1 // loop_footer
      %s22 = sadd.s32 1, %s18
    $region7: #{tpu_custom_call.1} parent=1 // loop_footer_branch
      %17 = sbr.rel target = $region3
    $region8: #{tpu_custom_call.1} parent=1 // loop_exit
      _
    %771 = vsyncpa [#allocation3], 1
    %s772 = scalar_lea.sflag [#allocation3], 1
    %773 = vsyncpa %s772, 1
    %774 = vsyncpa [#allocation5], 1
    %s775 = scalar_lea.sflag [#allocation5], 1
    %776 = vsyncpa %s775, 1

</llo_original>
